<compile_context>
chip_gen: v6e
topology: v6e:2x2x1
jax: 0.10.0
libtpu: 0.0.40
codegen_flags: <defaults>
</compile_context>

<pallas_src>
import jax
import jax.numpy as jnp
from jax.experimental import pallas as pl
from jax.experimental.pallas import tpu as pltpu

INPUT_DIM = 13   # features after dropping '대출등급'
OUTPUT_DIM = 7   # loan grades A..G
H1, H2, H3 = 64, 32, 16


def mlp_kernel(x_ref, w1_ref, b1_ref, w2_ref, b2_ref,
               w3_ref, b3_ref, w4_ref, b4_ref, o_ref):
    # x and weights arrive in bf16; MXU accumulates in f32, and bias/ReLU run
    # on the f32 accumulator. Whole 4-layer hot path per batch tile.
    x = x_ref[...]

    h = jnp.dot(x, w1_ref[...], preferred_element_type=jnp.float32) + b1_ref[...]
    h = jnp.maximum(h, 0.0)

    h = jnp.dot(h.astype(jnp.bfloat16), w2_ref[...],
                preferred_element_type=jnp.float32) + b2_ref[...]
    h = jnp.maximum(h, 0.0)

    h = jnp.dot(h.astype(jnp.bfloat16), w3_ref[...],
                preferred_element_type=jnp.float32) + b3_ref[...]
    h = jnp.maximum(h, 0.0)

    out = jnp.dot(h.astype(jnp.bfloat16), w4_ref[...],
                  preferred_element_type=jnp.float32) + b4_ref[...]
    # TODO(synk): if profiling shows the 7-lane masked stores (vst.msk)
    # dominating, pad OUTPUT_DIM to 128 in the wrapper for lane-dense stores.
    o_ref[...] = out.astype(o_ref.dtype)


def mlp_forward(x, params, *, tm=256):
    """x: (B, INPUT_DIM) float32. params: dict of (in,out) weights + (1,out) biases."""
    B, D = x.shape
    assert D == INPUT_DIM

    # Keep the tile a multiple of 8, cap at 512 (avoid spill-bound regime),
    # and shrink it for tiny batches so we don't pad excessively.
    tm = max(8, min(tm, 512))
    tm = min(tm, ((B + 7) // 8) * 8)

    # Pad the batch to a multiple of tm (ragged-batch support; padded rows are
    # discarded after the call). Fast path stays fully unmasked.
    b_pad = ((B + tm - 1) // tm) * tm
    if b_pad != B:
        x = jnp.pad(x, ((0, b_pad - B), (0, 0)))

    # Cast the dominant HBM traffic to bf16; biases stay f32.
    x_bf16 = x.astype(jnp.bfloat16)
    w = [params[f"w{i}"].astype(jnp.bfloat16) for i in range(1, 5)]
    b = [params[f"b{i}"].astype(jnp.float32) for i in range(1, 5)]

    full = lambda shape: pl.BlockSpec(shape, lambda i: (0, 0))

    out = pl.pallas_call(
        mlp_kernel,
        out_shape=jax.ShapeDtypeStruct((b_pad, OUTPUT_DIM), jnp.float32),
        grid=(b_pad // tm,),
        in_specs=[
            pl.BlockSpec((tm, INPUT_DIM), lambda i: (i, 0)),  # x tile over batch
            full(w[0].shape), full(b[0].shape),
            full(w[1].shape), full(b[1].shape),
            full(w[2].shape), full(b[2].shape),
            full(w[3].shape), full(b[3].shape),
        ],
        out_specs=pl.BlockSpec((tm, OUTPUT_DIM), lambda i: (i, 0)),
        compiler_params=pltpu.CompilerParams(
            dimension_semantics=("parallel",)),
    )(x_bf16, w[0], b[0], w[1], b[1], w[2], b[2], w[3], b[3])

    return out[:B]


def init_params(key):
    """Deterministic init mirroring nn.Linear shapes (stored transposed: (in, out))."""
    dims = [(INPUT_DIM, H1), (H1, H2), (H2, H3), (H3, OUTPUT_DIM)]
    params = {}
    for idx, (d_in, d_out) in enumerate(dims, start=1):
        key, kw, kb = jax.random.split(key, 3)
        bound = 1.0 / jnp.sqrt(d_in)  # matches torch.nn.Linear uniform init range
        params[f"w{idx}"] = jax.random.uniform(
            kw, (d_in, d_out), jnp.float32, -bound, bound)
        params[f"b{idx}"] = jax.random.uniform(
            kb, (1, d_out), jnp.float32, -bound, bound)
    return params


def reference_forward(x, params):
    """Pure-JAX reference using the same bf16-in / f32-accumulate recipe."""
    wb = [params[f"w{i}"].astype(jnp.bfloat16) for i in range(1, 5)]
    bb = [params[f"b{i}"].astype(jnp.float32) for i in range(1, 5)]
    h = x.astype(jnp.bfloat16)
    h = jnp.maximum(jnp.dot(h, wb[0], preferred_element_type=jnp.float32) + bb[0], 0.0)
    h = jnp.maximum(jnp.dot(h.astype(jnp.bfloat16), wb[1],
                            preferred_element_type=jnp.float32) + bb[1], 0.0)
    h = jnp.maximum(jnp.dot(h.astype(jnp.bfloat16), wb[2],
                            preferred_element_type=jnp.float32) + bb[2], 0.0)
    return jnp.dot(h.astype(jnp.bfloat16), wb[3],
                   preferred_element_type=jnp.float32) + bb[3]


if __name__ == "__main__":
    key = jax.random.PRNGKey(0)
    params = init_params(key)

    # Small ragged batch (exercises the padding path + shrunken tile).
    key, kx1 = jax.random.split(key)
    x_small = jax.random.normal(kx1, (20, INPUT_DIM), jnp.float32)
    out_small = jax.block_until_ready(mlp_forward(x_small, params))
    ref_small = reference_forward(x_small, params)
    assert out_small.shape == (20, OUTPUT_DIM)
    assert jnp.allclose(out_small, ref_small, atol=1e-2, rtol=1e-2)

    # Larger ragged batch (exercises tm=256 tiles + multi-step parallel grid).
    key, kx2 = jax.random.split(key)
    x_big = jax.random.normal(kx2, (1037, INPUT_DIM), jnp.float32)
    out_big = jax.block_until_ready(mlp_forward(x_big, params))
    ref_big = reference_forward(x_big, params)
    assert out_big.shape == (1037, OUTPUT_DIM)
    assert jnp.allclose(out_big, ref_big, atol=1e-2, rtol=1e-2)

    print("KERNEL_OK")
</pallas_src>

<mosaic_0001>
module attributes {stable_mosaic.version = 11 : i64} {
  func.func @mlp_kernel(%arg0: i32, %arg1: memref<24x13xbf16, #tpu.memory_space<vmem>>, %arg2: memref<13x64xbf16, #tpu.memory_space<vmem>>, %arg3: memref<1x64xf32, #tpu.memory_space<vmem>>, %arg4: memref<64x32xbf16, #tpu.memory_space<vmem>>, %arg5: memref<1x32xf32, #tpu.memory_space<vmem>>, %arg6: memref<32x16xbf16, #tpu.memory_space<vmem>>, %arg7: memref<1x16xf32, #tpu.memory_space<vmem>>, %arg8: memref<16x7xbf16, #tpu.memory_space<vmem>>, %arg9: memref<1x7xf32, #tpu.memory_space<vmem>>, %arg10: memref<24x7xf32, #tpu.memory_space<vmem>>) attributes {dimension_semantics = [#tpu.dimension_semantics<parallel>], iteration_bounds = array<i64: 1>, scalar_prefetch = 0 : i64, scratch_operands = 0 : i64, tpu.core_type = #tpu.core_type<tc>, window_params = [{transform_indices = @transform_0, window_bounds = array<i64: 24, 13>}, {pipeline_mode = #tpu.pipeline_mode<synchronous>, transform_indices = @transform_1, window_bounds = array<i64: 13, 64>}, {pipeline_mode = #tpu.pipeline_mode<synchronous>, transform_indices = @transform_2, window_bounds = array<i64: 1, 64>}, {pipeline_mode = #tpu.pipeline_mode<synchronous>, transform_indices = @transform_3, window_bounds = array<i64: 64, 32>}, {pipeline_mode = #tpu.pipeline_mode<synchronous>, transform_indices = @transform_4, window_bounds = array<i64: 1, 32>}, {pipeline_mode = #tpu.pipeline_mode<synchronous>, transform_indices = @transform_5, window_bounds = array<i64: 32, 16>}, {pipeline_mode = #tpu.pipeline_mode<synchronous>, transform_indices = @transform_6, window_bounds = array<i64: 1, 16>}, {pipeline_mode = #tpu.pipeline_mode<synchronous>, transform_indices = @transform_7, window_bounds = array<i64: 16, 7>}, {pipeline_mode = #tpu.pipeline_mode<synchronous>, transform_indices = @transform_8, window_bounds = array<i64: 1, 7>}, {transform_indices = @transform_9, window_bounds = array<i64: 24, 7>}]} {
    %c0 = arith.constant 0 : index
    %c0_0 = arith.constant 0 : index
    %0 = vector.load %arg1[%c0, %c0_0] : memref<24x13xbf16, #tpu.memory_space<vmem>>, vector<24x13xbf16>
    %c0_1 = arith.constant 0 : index
    %c0_2 = arith.constant 0 : index
    %1 = vector.load %arg2[%c0_1, %c0_2] : memref<13x64xbf16, #tpu.memory_space<vmem>>, vector<13x64xbf16>
    %cst = arith.constant dense<0.000000e+00> : vector<24x64xf32>
    %2 = tpu.matmul %0, %1, %cst {dimension_numbers = #tpu.dot_dimension_numbers<[1], [0], [0], [1], [0, 0, 1, 1], [], []>} : vector<24x13xbf16>, vector<13x64xbf16>, vector<24x64xf32> -> vector<24x64xf32>
    %c0_3 = arith.constant 0 : index
    %c0_4 = arith.constant 0 : index
    %3 = vector.load %arg3[%c0_3, %c0_4] : memref<1x64xf32, #tpu.memory_space<vmem>>, vector<1x64xf32>
    %4 = vector.broadcast %3 : vector<1x64xf32> to vector<24x64xf32>
    %5 = arith.addf %2, %4 : vector<24x64xf32>
    %cst_5 = arith.constant 0.000000e+00 : f32
    %6 = vector.broadcast %cst_5 : f32 to vector<24x64xf32>
    %7 = arith.maximumf %5, %6 : vector<24x64xf32>
    %8 = arith.truncf %7 : vector<24x64xf32> to vector<24x64xbf16>
    %c0_6 = arith.constant 0 : index
    %c0_7 = arith.constant 0 : index
    %9 = vector.load %arg4[%c0_6, %c0_7] : memref<64x32xbf16, #tpu.memory_space<vmem>>, vector<64x32xbf16>
    %cst_8 = arith.constant dense<0.000000e+00> : vector<24x32xf32>
    %10 = tpu.matmul %8, %9, %cst_8 {dimension_numbers = #tpu.dot_dimension_numbers<[1], [0], [0], [1], [0, 0, 1, 1], [], []>} : vector<24x64xbf16>, vector<64x32xbf16>, vector<24x32xf32> -> vector<24x32xf32>
    %c0_9 = arith.constant 0 : index
    %c0_10 = arith.constant 0 : index
    %11 = vector.load %arg5[%c0_9, %c0_10] : memref<1x32xf32, #tpu.memory_space<vmem>>, vector<1x32xf32>
    %12 = vector.broadcast %11 : vector<1x32xf32> to vector<24x32xf32>
    %13 = arith.addf %10, %12 : vector<24x32xf32>
    %cst_11 = arith.constant 0.000000e+00 : f32
    %14 = vector.broadcast %cst_11 : f32 to vector<24x32xf32>
    %15 = arith.maximumf %13, %14 : vector<24x32xf32>
    %16 = arith.truncf %15 : vector<24x32xf32> to vector<24x32xbf16>
    %c0_12 = arith.constant 0 : index
    %c0_13 = arith.constant 0 : index
    %17 = vector.load %arg6[%c0_12, %c0_13] : memref<32x16xbf16, #tpu.memory_space<vmem>>, vector<32x16xbf16>
    %cst_14 = arith.constant dense<0.000000e+00> : vector<24x16xf32>
    %18 = tpu.matmul %16, %17, %cst_14 {dimension_numbers = #tpu.dot_dimension_numbers<[1], [0], [0], [1], [0, 0, 1, 1], [], []>} : vector<24x32xbf16>, vector<32x16xbf16>, vector<24x16xf32> -> vector<24x16xf32>
    %c0_15 = arith.constant 0 : index
    %c0_16 = arith.constant 0 : index
    %19 = vector.load %arg7[%c0_15, %c0_16] : memref<1x16xf32, #tpu.memory_space<vmem>>, vector<1x16xf32>
    %20 = vector.broadcast %19 : vector<1x16xf32> to vector<24x16xf32>
    %21 = arith.addf %18, %20 : vector<24x16xf32>
    %cst_17 = arith.constant 0.000000e+00 : f32
    %22 = vector.broadcast %cst_17 : f32 to vector<24x16xf32>
    %23 = arith.maximumf %21, %22 : vector<24x16xf32>
    %24 = arith.truncf %23 : vector<24x16xf32> to vector<24x16xbf16>
    %c0_18 = arith.constant 0 : index
    %c0_19 = arith.constant 0 : index
    %25 = vector.load %arg8[%c0_18, %c0_19] : memref<16x7xbf16, #tpu.memory_space<vmem>>, vector<16x7xbf16>
    %cst_20 = arith.constant dense<0.000000e+00> : vector<24x7xf32>
    %26 = tpu.matmul %24, %25, %cst_20 {dimension_numbers = #tpu.dot_dimension_numbers<[1], [0], [0], [1], [0, 0, 1, 1], [], []>} : vector<24x16xbf16>, vector<16x7xbf16>, vector<24x7xf32> -> vector<24x7xf32>
    %c0_21 = arith.constant 0 : index
    %c0_22 = arith.constant 0 : index
    %27 = vector.load %arg9[%c0_21, %c0_22] : memref<1x7xf32, #tpu.memory_space<vmem>>, vector<1x7xf32>
    %28 = vector.broadcast %27 : vector<1x7xf32> to vector<24x7xf32>
    %29 = arith.addf %26, %28 : vector<24x7xf32>
    %c0_23 = arith.constant 0 : index
    %c0_24 = arith.constant 0 : index
    %30 = vector.load %arg10[%c0_23, %c0_24] : memref<24x7xf32, #tpu.memory_space<vmem>>, vector<24x7xf32>
    tpu.vector_store %arg10[%c0_23, %c0_24], %29 {strides = array<i32>} : memref<24x7xf32, #tpu.memory_space<vmem>>, vector<24x7xf32>,
    return
  }
  func.func @transform_0(%arg0: i32) -> (i32, i32) {
    %c0_i32 = arith.constant 0 : i32
    %c0_i32_0 = arith.constant 0 : i32
    return %arg0, %c0_i32 : i32, i32
  }
  func.func @transform_1(%arg0: i32) -> (i32, i32) {
    %c0_i32 = arith.constant 0 : i32
    %c0_i32_0 = arith.constant 0 : i32
    %c0_i32_1 = arith.constant 0 : i32
    return %c0_i32, %c0_i32_0 : i32, i32
  }
  func.func @transform_2(%arg0: i32) -> (i32, i32) {
    %c0_i32 = arith.constant 0 : i32
    %c0_i32_0 = arith.constant 0 : i32
    %c0_i32_1 = arith.constant 0 : i32
    return %c0_i32, %c0_i32_0 : i32, i32
  }
  func.func @transform_3(%arg0: i32) -> (i32, i32) {
    %c0_i32 = arith.constant 0 : i32
    %c0_i32_0 = arith.constant 0 : i32
    %c0_i32_1 = arith.constant 0 : i32
    return %c0_i32, %c0_i32_0 : i32, i32
  }
  func.func @transform_4(%arg0: i32) -> (i32, i32) {
    %c0_i32 = arith.constant 0 : i32
    %c0_i32_0 = arith.constant 0 : i32
    %c0_i32_1 = arith.constant 0 : i32
    return %c0_i32, %c0_i32_0 : i32, i32
  }
  func.func @transform_5(%arg0: i32) -> (i32, i32) {
    %c0_i32 = arith.constant 0 : i32
    %c0_i32_0 = arith.constant 0 : i32
    %c0_i32_1 = arith.constant 0 : i32
    return %c0_i32, %c0_i32_0 : i32, i32
  }
  func.func @transform_6(%arg0: i32) -> (i32, i32) {
    %c0_i32 = arith.constant 0 : i32
    %c0_i32_0 = arith.constant 0 : i32
    %c0_i32_1 = arith.constant 0 : i32
    return %c0_i32, %c0_i32_0 : i32, i32
  }
  func.func @transform_7(%arg0: i32) -> (i32, i32) {
    %c0_i32 = arith.constant 0 : i32
    %c0_i32_0 = arith.constant 0 : i32
    %c0_i32_1 = arith.constant 0 : i32
    return %c0_i32, %c0_i32_0 : i32, i32
  }
  func.func @transform_8(%arg0: i32) -> (i32, i32) {
    %c0_i32 = arith.constant 0 : i32
    %c0_i32_0 = arith.constant 0 : i32
    %c0_i32_1 = arith.constant 0 : i32
    return %c0_i32, %c0_i32_0 : i32, i32
  }
  func.func @transform_9(%arg0: i32) -> (i32, i32) {
    %c0_i32 = arith.constant 0 : i32
    %c0_i32_0 = arith.constant 0 : i32
    return %arg0, %c0_i32 : i32, i32
  }
}

</mosaic_0001>

<llo_original>
// kernel: tpu_custom_call.1
$region0: #{tpu_custom_call.1}
  #allocation0 [shape = 'u32[]', space=smem, size = 0x4, offset = 0x4, fixed_abs, tag = 'smem constant byte address 0x4 - core index']
  #allocation1 [shape = 'u32[144,128]{1,0:T(1,128)}', space=vmem, size = 0x12000, scoped, tag = 'internal scratch']
  %s0 = inlined_call_operand.vmem [shape: bf16[24,13], index: 0, kind: input, shape index: {}]
  %s1 = inlined_call_operand.vmem [shape: bf16[13,64], index: 1, kind: input, shape index: {}]
  %s2 = inlined_call_operand.vmem [shape: f32[1,64], index: 2, kind: input, shape index: {}]
  %s3 = inlined_call_operand.vmem [shape: bf16[64,32], index: 3, kind: input, shape index: {}]
  %s4 = inlined_call_operand.vmem [shape: f32[1,32], index: 4, kind: input, shape index: {}]
  %s5 = inlined_call_operand.vmem [shape: bf16[32,16], index: 5, kind: input, shape index: {}]
  %s6 = inlined_call_operand.vmem [shape: f32[1,16], index: 6, kind: input, shape index: {}]
  %s7 = inlined_call_operand.vmem [shape: bf16[16,7], index: 7, kind: input, shape index: {}]
  %s8 = inlined_call_operand.vmem [shape: f32[1,7], index: 8, kind: input, shape index: {}]
  %s9 = inlined_call_operand.vmem [shape: f32[24,7], index: 9, kind: output, shape index: {}]
  %s10 = sld [smem:[#allocation0]]
  $region46: #{tpu_custom_call.1} parent=0
    _
  %s12 = ssub.s32 1, %s10
  %s13 = scalar_select 0, %s12, %s10
  // Predicated region
  $region2: #{tpu_custom_call.1} parent=0 // pred_check
    _
  $region3: #{tpu_custom_call.1} parent=0 // pred_check_branch
    %15 = sbr.rel (0) target = $region5
  $region4: #{tpu_custom_call.1} parent=0 // pred_region
    _
  $region5: #{tpu_custom_call.1} parent=0 // pred_fallthru
    _
  // Predicated region
  $region6: #{tpu_custom_call.1} parent=0 // pred_check
    _
  $region7: #{tpu_custom_call.1} parent=0 // pred_check_branch
    %17 = sbr.rel (0) target = $region9
  $region8: #{tpu_custom_call.1} parent=0 // pred_region
    _
  $region9: #{tpu_custom_call.1} parent=0 // pred_fallthru
    _
  // Predicated region
  $region10: #{tpu_custom_call.1} parent=0 // pred_check
    _
  $region11: #{tpu_custom_call.1} parent=0 // pred_check_branch
    %19 = sbr.rel (0) target = $region13
  $region12: #{tpu_custom_call.1} parent=0 // pred_region
    _
  $region13: #{tpu_custom_call.1} parent=0 // pred_fallthru
    _
  // Predicated region
  $region14: #{tpu_custom_call.1} parent=0 // pred_check
    _
  $region15: #{tpu_custom_call.1} parent=0 // pred_check_branch
    %21 = sbr.rel (0) target = $region17
  $region16: #{tpu_custom_call.1} parent=0 // pred_region
    _
  $region17: #{tpu_custom_call.1} parent=0 // pred_fallthru
    _
  // Predicated region
  $region18: #{tpu_custom_call.1} parent=0 // pred_check
    _
  $region19: #{tpu_custom_call.1} parent=0 // pred_check_branch
    %23 = sbr.rel (0) target = $region21
  $region20: #{tpu_custom_call.1} parent=0 // pred_region
    _
  $region21: #{tpu_custom_call.1} parent=0 // pred_fallthru
    _
  // Predicated region
  $region22: #{tpu_custom_call.1} parent=0 // pred_check
    _
  $region23: #{tpu_custom_call.1} parent=0 // pred_check_branch
    %25 = sbr.rel (0) target = $region25
  $region24: #{tpu_custom_call.1} parent=0 // pred_region
    _
  $region25: #{tpu_custom_call.1} parent=0 // pred_fallthru
    _
  // Predicated region
  $region26: #{tpu_custom_call.1} parent=0 // pred_check
    _
  $region27: #{tpu_custom_call.1} parent=0 // pred_check_branch
    %27 = sbr.rel (0) target = $region29
  $region28: #{tpu_custom_call.1} parent=0 // pred_region
    _
  $region29: #{tpu_custom_call.1} parent=0 // pred_fallthru
    _
  // Predicated region
  $region30: #{tpu_custom_call.1} parent=0 // pred_check
    _
  $region31: #{tpu_custom_call.1} parent=0 // pred_check_branch
    %29 = sbr.rel (0) target = $region33
  $region32: #{tpu_custom_call.1} parent=0 // pred_region
    _
  $region33: #{tpu_custom_call.1} parent=0 // pred_fallthru
    _
  // Predicated region
  $region34: #{tpu_custom_call.1} parent=0 // pred_check
    _
  $region35: #{tpu_custom_call.1} parent=0 // pred_check_branch
    %31 = sbr.rel (0) target = $region37
  $region36: #{tpu_custom_call.1} parent=0 // pred_region
    _
  $region37: #{tpu_custom_call.1} parent=0 // pred_fallthru
    _
  %v33 = vld [vmem:[%s0] sm:$0xf]
  %v34 = vld [vmem:[%s0 + $0x4] sm:$0xf]
  %v35 = vld [vmem:[%s0 + $0x8] sm:$0xf]
  %v36 = vld [vmem:[%s1] sm:$0xf]
  %v37 = vld [vmem:[%s1 + $0x4] sm:$0x7]
  %v38 = vld [vmem:[%s2] sm:$0x1]
  %v40 = vlaneseq
  %v41 = vshrl.u32 %v40, 7
  %v42 = vsub.s32 0, %v41
  %v43 = vrot.slane %v38, %v42
  %v48 = vunpack.c.l.b16 %v33
  %v49 = vunpack.c.l.b16 %v34
  %v50 = vunpack.c.l.b16 %v35
  %v51 = vpack.c.b16 %v49, %v48
  %v52 = vpack.c.b16 %v50, %v50
  %v55 = vunpack.c.l.b16 %v36
  %v56 = vunpack.c.l.b16 %v37
  %v57 = vpack.c.b16 %v56, %v55
  %vm58 = vcmask 105472
  %v60 = vsel %vm58, %v51, 0
  %v63 = vsel %vm58, %v52, 0
  %vm65 = vcmask 1045504
  %vm66 = vcmask 1046528
  %v67 = vsel %vm65, 4294967295, 65535
  %v68 = vsel %vm66, %v67, 0
  %v70 = vand.u32 %v57, %v68
  %72 = vmatprep.subr.bf16.mxu0 0
  %73 = vmatpush1.bf16.msra.mxu0 0
  %74 = vmatprep.subr.bf16.mxu0 0
  %75 = vmatpush1.bf16.msra.mxu0 0
  %76 = vmatprep.subr.bf16.mxu0 0
  %77 = vmatpush1.bf16.msra.mxu0 0
  %78 = vmatprep.subr.bf16.mxu0 0
  %79 = vmatpush1.bf16.msra.mxu0 0
  %80 = vmatprep.subr.bf16.mxu0 0
  %81 = vmatpush1.bf16.msra.mxu0 0
  %82 = vmatprep.subr.bf16.mxu0 0
  %83 = vmatpush1.bf16.msra.mxu0 0
  %84 = vmatprep.subr.bf16.mxu0 0
  %85 = vmatpush1.bf16.msra.mxu0 0
  %86 = vmatprep.subr.bf16.mxu0 0
  %87 = vmatpush1.bf16.msra.mxu0 %v70
  %88 = vmatprep.subr.bf16.mxu0 0
  %89 = vmatpush2.bf16.msra.mxu0 0
  %90 = vmatprep.subr.bf16.mxu0 0
  %91 = vmatpush2.bf16.msra.mxu0 0
  %92 = vmatprep.subr.bf16.mxu0 0
  %93 = vmatpush2.bf16.msra.mxu0 0
  %94 = vmatprep.subr.bf16.mxu0 0
  %95 = vmatpush2.bf16.msra.mxu0 0
  %96 = vmatprep.subr.bf16.mxu0 0
  %97 = vmatpush2.bf16.msra.mxu0 0
  %98 = vmatprep.subr.bf16.mxu0 0
  %99 = vmatpush2.bf16.msra.mxu0 0
  %100 = vmatprep.subr.bf16.mxu0 0
  %101 = vmatpush2.bf16.msra.mxu0 0
  %102 = vmatprep.subr.bf16.mxu0 0
  %103 = vmatpush2.bf16.msra.mxu0 0
  %104 = vmatprep.mubr.bf16.mxu0 0
  %105 = vmatmul.mubr.bf16.gmra.mxu0 %v60
  %v106 = vpop.f32.mrf.mxu0
  %v107 = vadd.f32 %v43, %v106
  %v108 = vpop.f32.mrf.mxu0
  %v109 = vpop.f32.mrf.mxu0
  %v110 = vadd.f32 %v43, %v109
  %v111 = vpop.f32.mrf.mxu0
  %112 = vmatprep.mubr.bf16.mxu0 0
  %113 = vmatmul.mubr.bf16.gmra.mxu0 %v63
  %v114 = vpop.f32.mrf.mxu0
  %v115 = vadd.f32 %v43, %v114
  %v116 = vpop.f32.mrf.mxu0
  %v117 = vpop.f32.mrf.mxu0
  %v118 = vpop.f32.mrf.mxu0
  %119 = vdwg.mxu0
  %v120 = vmax.f32 %v107, 0.0
  %v121 = vmax.f32 %v110, 0.0
  %v122 = vmax.f32 %v115, 0.0
  %v123 = vpack.c.bf16 %v121, %v120
  %v124 = vpack.c.bf16 %v122, %v122
  %v125 = vld [vmem:[%s3] sm:$0xf]
  %v126 = vld [vmem:[%s3 + $0x4] sm:$0xf]
  %v127 = vld [vmem:[%s3 + $0x8] sm:$0xf]
  %v128 = vld [vmem:[%s3 + $0xc] sm:$0xf]
  %v129 = vld [vmem:[%s3 + $0x10] sm:$0xf]
  %v130 = vld [vmem:[%s3 + $0x14] sm:$0xf]
  %v131 = vld [vmem:[%s3 + $0x18] sm:$0xf]
  %v132 = vld [vmem:[%s3 + $0x1c] sm:$0xf]
  %v133 = vld [vmem:[%s4] sm:$0x1]
  %v135 = vlaneseq
  %v136 = vshrl.u32 %v135, 7
  %v137 = vsub.s32 0, %v136
  %v138 = vrot.slane %v133, %v137
  %v148 = vunpack.c.l.b16 %v125
  %v149 = vunpack.c.l.b16 %v126
  %v150 = vunpack.c.l.b16 %v127
  %v151 = vunpack.c.l.b16 %v128
  %v152 = vunpack.c.l.b16 %v129
  %v153 = vunpack.c.l.b16 %v130
  %v154 = vunpack.c.l.b16 %v131
  %v155 = vunpack.c.l.b16 %v132
  %v156 = vpack.c.b16 %v149, %v148
  %v157 = vpack.c.b16 %v151, %v150
  %v158 = vpack.c.b16 %v153, %v152
  %v159 = vpack.c.b16 %v155, %v154
  %vm164 = vcmask 523264
  %v166 = vsel %vm164, %v123, 0
  %v169 = vsel %vm164, %v124, 0
  %171 = vmatprep.subr.bf16.mxu0 0
  %172 = vmatpush1.bf16.msra.mxu0 0
  %173 = vmatprep.subr.bf16.mxu0 0
  %174 = vmatpush1.bf16.msra.mxu0 0
  %175 = vmatprep.subr.bf16.mxu0 0
  %176 = vmatpush1.bf16.msra.mxu0 0
  %177 = vmatprep.subr.bf16.mxu0 0
  %178 = vmatpush1.bf16.msra.mxu0 0
  %179 = vmatprep.subr.bf16.mxu0 0
  %180 = vmatpush1.bf16.msra.mxu0 %v159
  %181 = vmatprep.subr.bf16.mxu0 0
  %182 = vmatpush1.bf16.msra.mxu0 %v158
  %183 = vmatprep.subr.bf16.mxu0 0
  %184 = vmatpush1.bf16.msra.mxu0 %v157
  %185 = vmatprep.subr.bf16.mxu0 0
  %186 = vmatpush1.bf16.msra.mxu0 %v156
  %187 = vmatprep.subr.bf16.mxu0 0
  %188 = vmatpush2.bf16.msra.mxu0 0
  %189 = vmatprep.subr.bf16.mxu0 0
  %190 = vmatpush2.bf16.msra.mxu0 0
  %191 = vmatprep.subr.bf16.mxu0 0
  %192 = vmatpush2.bf16.msra.mxu0 0
  %193 = vmatprep.subr.bf16.mxu0 0
  %194 = vmatpush2.bf16.msra.mxu0 0
  %195 = vmatprep.subr.bf16.mxu0 0
  %196 = vmatpush2.bf16.msra.mxu0 0
  %197 = vmatprep.subr.bf16.mxu0 0
  %198 = vmatpush2.bf16.msra.mxu0 0
  %199 = vmatprep.subr.bf16.mxu0 0
  %200 = vmatpush2.bf16.msra.mxu0 0
  %201 = vmatprep.subr.bf16.mxu0 0
  %202 = vmatpush2.bf16.msra.mxu0 0
  %203 = vmatprep.mubr.bf16.mxu0 0
  %204 = vmatmul.mubr.bf16.gmra.mxu0 %v166
  %v205 = vpop.f32.mrf.mxu0
  %v206 = vadd.f32 %v138, %v205
  %v207 = vpop.f32.mrf.mxu0
  %v208 = vpop.f32.mrf.mxu0
  %v209 = vadd.f32 %v138, %v208
  %v210 = vpop.f32.mrf.mxu0
  %211 = vmatprep.mubr.bf16.mxu0 0
  %212 = vmatmul.mubr.bf16.gmra.mxu0 %v169
  %v213 = vpop.f32.mrf.mxu0
  %v214 = vadd.f32 %v138, %v213
  %v215 = vpop.f32.mrf.mxu0
  %v216 = vpop.f32.mrf.mxu0
  %v217 = vpop.f32.mrf.mxu0
  %218 = vdwg.mxu0
  %v219 = vmax.f32 %v206, 0.0
  %v220 = vmax.f32 %v209, 0.0
  %v221 = vmax.f32 %v214, 0.0
  %v222 = vpack.c.bf16 %v220, %v219
  %v223 = vpack.c.bf16 %v221, %v221
  %v224 = vld [vmem:[%s5] sm:$0xf]
  %v225 = vld [vmem:[%s5 + $0x4] sm:$0xf]
  %v226 = vld [vmem:[%s5 + $0x8] sm:$0xf]
  %v227 = vld [vmem:[%s5 + $0xc] sm:$0xf]
  %v228 = vld [vmem:[%s6] sm:$0x1]
  %v230 = vlaneseq
  %v231 = vshrl.u32 %v230, 7
  %v232 = vsub.s32 0, %v231
  %v233 = vrot.slane %v228, %v232
  %v239 = vunpack.c.l.b16 %v224
  %v240 = vunpack.c.l.b16 %v225
  %v241 = vunpack.c.l.b16 %v226
  %v242 = vunpack.c.l.b16 %v227
  %v243 = vpack.c.b16 %v240, %v239
  %v244 = vpack.c.b16 %v242, %v241
  %vm247 = vcmask 261120
  %v249 = vsel %vm247, %v222, 0
  %v252 = vsel %vm247, %v223, 0
  %254 = vmatprep.subr.bf16.mxu0 0
  %255 = vmatpush1.bf16.msra.mxu0 0
  %256 = vmatprep.subr.bf16.mxu0 0
  %257 = vmatpush1.bf16.msra.mxu0 0
  %258 = vmatprep.subr.bf16.mxu0 0
  %259 = vmatpush1.bf16.msra.mxu0 0
  %260 = vmatprep.subr.bf16.mxu0 0
  %261 = vmatpush1.bf16.msra.mxu0 0
  %262 = vmatprep.subr.bf16.mxu0 0
  %263 = vmatpush1.bf16.msra.mxu0 0
  %264 = vmatprep.subr.bf16.mxu0 0
  %265 = vmatpush1.bf16.msra.mxu0 0
  %266 = vmatprep.subr.bf16.mxu0 0
  %267 = vmatpush1.bf16.msra.mxu0 %v244
  %268 = vmatprep.subr.bf16.mxu0 0
  %269 = vmatpush1.bf16.msra.mxu0 %v243
  %270 = vmatprep.subr.bf16.mxu0 0
  %271 = vmatpush2.bf16.msra.mxu0 0
  %272 = vmatprep.subr.bf16.mxu0 0
  %273 = vmatpush2.bf16.msra.mxu0 0
  %274 = vmatprep.subr.bf16.mxu0 0
  %275 = vmatpush2.bf16.msra.mxu0 0
  %276 = vmatprep.subr.bf16.mxu0 0
  %277 = vmatpush2.bf16.msra.mxu0 0
  %278 = vmatprep.subr.bf16.mxu0 0
  %279 = vmatpush2.bf16.msra.mxu0 0
  %280 = vmatprep.subr.bf16.mxu0 0
  %281 = vmatpush2.bf16.msra.mxu0 0
  %282 = vmatprep.subr.bf16.mxu0 0
  %283 = vmatpush2.bf16.msra.mxu0 0
  %284 = vmatprep.subr.bf16.mxu0 0
  %285 = vmatpush2.bf16.msra.mxu0 0
  %286 = vmatprep.mubr.bf16.mxu0 0
  %287 = vmatmul.mubr.bf16.gmra.mxu0 %v249
  %v288 = vpop.f32.mrf.mxu0
  %v289 = vadd.f32 %v233, %v288
  %v290 = vpop.f32.mrf.mxu0
  %v291 = vpop.f32.mrf.mxu0
  %v292 = vadd.f32 %v233, %v291
  %v293 = vpop.f32.mrf.mxu0
  %294 = vmatprep.mubr.bf16.mxu0 0
  %295 = vmatmul.mubr.bf16.gmra.mxu0 %v252
  %v296 = vpop.f32.mrf.mxu0
  %v297 = vadd.f32 %v233, %v296
  %v298 = vpop.f32.mrf.mxu0
  %v299 = vpop.f32.mrf.mxu0
  %v300 = vpop.f32.mrf.mxu0
  %301 = vdwg.mxu0
  %v302 = vmax.f32 %v289, 0.0
  %v303 = vmax.f32 %v292, 0.0
  %v304 = vmax.f32 %v297, 0.0
  %v305 = vpack.c.bf16 %v303, %v302
  %v306 = vpack.c.bf16 %v304, %v304
  %v307 = vld [vmem:[%s7] sm:$0xf]
  %v308 = vld [vmem:[%s7 + $0x4] sm:$0xf]
  %v309 = vld [vmem:[%s8] sm:$0x1]
  %v311 = vlaneseq
  %v312 = vshrl.u32 %v311, 7
  %v313 = vsub.s32 0, %v312
  %v314 = vrot.slane %v309, %v313
  %v318 = vunpack.c.l.b16 %v307
  %v319 = vunpack.c.l.b16 %v308
  %v320 = vpack.c.b16 %v319, %v318
  %vm322 = vcmask 130048
  %v324 = vsel %vm322, %v305, 0
  %v327 = vsel %vm322, %v306, 0
  %329 = vmatprep.subr.bf16.mxu0 0
  %330 = vmatpush1.bf16.msra.mxu0 0
  %331 = vmatprep.subr.bf16.mxu0 0
  %332 = vmatpush1.bf16.msra.mxu0 0
  %333 = vmatprep.subr.bf16.mxu0 0
  %334 = vmatpush1.bf16.msra.mxu0 0
  %335 = vmatprep.subr.bf16.mxu0 0
  %336 = vmatpush1.bf16.msra.mxu0 0
  %337 = vmatprep.subr.bf16.mxu0 0
  %338 = vmatpush1.bf16.msra.mxu0 0
  %339 = vmatprep.subr.bf16.mxu0 0
  %340 = vmatpush1.bf16.msra.mxu0 0
  %341 = vmatprep.subr.bf16.mxu0 0
  %342 = vmatpush1.bf16.msra.mxu0 0
  %343 = vmatprep.subr.bf16.mxu0 0
  %344 = vmatpush1.bf16.msra.mxu0 %v320
  %345 = vmatprep.subr.bf16.mxu0 0
  %346 = vmatpush2.bf16.msra.mxu0 0
  %347 = vmatprep.subr.bf16.mxu0 0
  %348 = vmatpush2.bf16.msra.mxu0 0
  %349 = vmatprep.subr.bf16.mxu0 0
  %350 = vmatpush2.bf16.msra.mxu0 0
  %351 = vmatprep.subr.bf16.mxu0 0
  %352 = vmatpush2.bf16.msra.mxu0 0
  %353 = vmatprep.subr.bf16.mxu0 0
  %354 = vmatpush2.bf16.msra.mxu0 0
  %355 = vmatprep.subr.bf16.mxu0 0
  %356 = vmatpush2.bf16.msra.mxu0 0
  %357 = vmatprep.subr.bf16.mxu0 0
  %358 = vmatpush2.bf16.msra.mxu0 0
  %359 = vmatprep.subr.bf16.mxu0 0
  %360 = vmatpush2.bf16.msra.mxu0 0
  %361 = vmatprep.mubr.bf16.mxu0 0
  %362 = vmatmul.mubr.bf16.gmra.mxu0 %v324
  %v363 = vpop.f32.mrf.mxu0
  %v364 = vadd.f32 %v314, %v363
  %v365 = vpop.f32.mrf.mxu0
  %v366 = vpop.f32.mrf.mxu0
  %v367 = vadd.f32 %v314, %v366
  %v368 = vpop.f32.mrf.mxu0
  %369 = vmatprep.mubr.bf16.mxu0 0
  %370 = vmatmul.mubr.bf16.gmra.mxu0 %v327
  %v371 = vpop.f32.mrf.mxu0
  %v372 = vadd.f32 %v314, %v371
  %v373 = vpop.f32.mrf.mxu0
  %v374 = vpop.f32.mrf.mxu0
  %v375 = vpop.f32.mrf.mxu0
  %376 = vdwg.mxu0
  %vm377 = vcmask 56320
  %378 = vst.msk [vmem:[%s9] sm:$0xff] %vm377, %v364
  %379 = vst.msk [vmem:[%s9 + $0x8] sm:$0xff] %vm377, %v367
  %380 = vst.msk [vmem:[%s9 + $0x10] sm:$0xff] %vm377, %v372
  // Predicated region
  $region38: #{tpu_custom_call.1} parent=0 // pred_check
    _
  $region39: #{tpu_custom_call.1} parent=0 // pred_check_branch
    %382 = sbr.rel (0) target = $region41
  $region40: #{tpu_custom_call.1} parent=0 // pred_region
    _
  $region41: #{tpu_custom_call.1} parent=0 // pred_fallthru
    _
  // Predicated region
  $region42: #{tpu_custom_call.1} parent=0 // pred_check
    _
  $region43: #{tpu_custom_call.1} parent=0 // pred_check_branch
    %384 = sbr.rel (0) target = $region45
  $region44: #{tpu_custom_call.1} parent=0 // pred_region
    _
  $region45: #{tpu_custom_call.1} parent=0 // pred_fallthru
    _

</llo_original>
